<compile_context>
chip_gen: v7x
topology: tpu7x:2x2x1
jax: 0.10.0
libtpu: 0.0.40
codegen_flags: <defaults>
</compile_context>

<pallas_src>
import jax
import jax.numpy as jnp
import numpy as np
from jax.experimental import pallas as pl
from jax.experimental.pallas import tpu as pltpu

_LANE = 128
_SQRT_HALF = 0.7071067811865476


def _round_up(x, m):
    return ((x + m - 1) // m) * m


def _gelu_exact(h):
    # Exact (erf-based) GELU, matching torch.nn.GELU() default. f32 math.
    return 0.5 * h * (1.0 + jax.lax.erf(h * jnp.float32(_SQRT_HALF)))


# --------------------------------------------------------------------------
# Kernels
# --------------------------------------------------------------------------
def _ffn_kernel_resident(x_ref, w1_ref, b1_ref, w2_ref, b2_ref, o_ref):
    # x_ref: (TM, dim); w1_ref: (dim, inner); b1_ref: (1, inner);
    # w2_ref: (inner, dim); b2_ref: (1, dim); o_ref: (TM, dim)
    # NOTE: matmuls run at the MXU's default contraction precision for the
    # input dtype; accumulation is f32 via preferred_element_type.
    h = jnp.dot(x_ref[...], w1_ref[...], preferred_element_type=jnp.float32)
    h = _gelu_exact(h + b1_ref[...])
    # Dropout(p=0.0) is identity.
    y = jnp.dot(h.astype(w2_ref.dtype), w2_ref[...],
                preferred_element_type=jnp.float32)
    o_ref[...] = (y + b2_ref[...]).astype(o_ref.dtype)


def _ffn_kernel_tiled(x_ref, w1_ref, b1_ref, w2_ref, b2_ref, o_ref, acc_ref):
    # Inner-dim tiled path: grid = (row_tiles, inner_tiles).
    # x_ref: (TM, dim); w1_ref: (dim, TK); b1_ref: (1, TK);
    # w2_ref: (TK, dim); b2_ref: (1, dim); o_ref: (TM, dim); acc_ref: f32 (TM, dim)
    k = pl.program_id(1)

    @pl.when(k == 0)
    def _():
        acc_ref[...] = jnp.zeros_like(acc_ref)

    h = jnp.dot(x_ref[...], w1_ref[...], preferred_element_type=jnp.float32)
    h = _gelu_exact(h + b1_ref[...])          # GELU is elementwise -> per-chunk OK
    acc_ref[...] += jnp.dot(h.astype(w2_ref.dtype), w2_ref[...],
                            preferred_element_type=jnp.float32)

    @pl.when(k == pl.num_programs(1) - 1)
    def _():
        o_ref[...] = (acc_ref[...] + b2_ref[...]).astype(o_ref.dtype)


# --------------------------------------------------------------------------
# Planning helpers
# --------------------------------------------------------------------------
def _vmem_budget_bytes():
    cap = 64 * 1024 * 1024  # conservative fallback (v7x per-TensorCore VMEM)
    try:
        info = pltpu.get_tpu_info()
        for name in ("vmem_capacity_bytes", "vmem_bytes", "vmem_size_bytes"):
            val = getattr(info, name, None)
            if val:
                cap = int(val)
                break
    except Exception:
        pass
    # ~85%: headroom for Mosaic-internal scratch; ~108 MiB on v5e/v6e, ~54 MiB on v7x.
    return int(cap * 0.85)


def _pick_tm(n, sub, target):
    tm = min(target, _round_up(n, sub))
    # Ensure >=2 row tiles when possible so the "parallel" axis can shard
    # across v7x's two TensorCores (one extra ~0.35us step on v5e/v6e).
    if n > sub and pl.cdiv(n, tm) < 2:
        tm = _round_up(pl.cdiv(n, 2), sub)
    return max(tm, sub)


def _resident_bytes(tm, dim, inner, act_bytes, w_bytes, w_bufs):
    act = 2 * 2 * tm * dim * act_bytes                      # x + out tiles, double-buffered
    wts = w_bufs * (2 * dim * inner + inner + dim) * w_bytes
    hid = 3 * tm * inner * 4                                # f32 hidden + GELU temporaries
    return act + wts + hid


def _tiled_bytes(tm, tk, dim, act_bytes, w_bytes):
    act = 2 * 2 * tm * dim * act_bytes                      # x + out tiles
    wts = 2 * (2 * dim * tk + tk + dim) * w_bytes           # streamed W1/W2/b1/b2 blocks
    acc = tm * dim * 4                                      # f32 accumulator scratch
    hid = 3 * tm * tk * 4                                   # f32 hidden chunk + temps
    return act + wts + acc + hid


def _weight_spec(shape, index_map, single_buffered):
    if single_buffered:
        # Constant index_map -> double-buffering buys nothing; halve the footprint.
        return pl.BlockSpec(shape, index_map, pipeline_mode=pl.Buffered(1))
    return pl.BlockSpec(shape, index_map)


# --------------------------------------------------------------------------
# pallas_call wrapper
# --------------------------------------------------------------------------
@jax.jit
def _feedforward_impl(x2, w1, b1, w2, b2):
    n, dim = x2.shape
    inner = w1.shape[1]
    out_dtype = x2.dtype

    act_bytes = x2.dtype.itemsize
    w_bytes = w1.dtype.itemsize
    sub = 32 // act_bytes                   # sublane packing: 8 f32 / 16 bf16 / 32 int8

    # Lane-dense padding for small dims (demo dim=32). Zero padding is exact:
    # padded x cols hit zero W1 rows, padded hidden cols are GELU(0)=0, padded
    # output cols come only from zero W2 cols / zero bias and are sliced off.
    dim_p = _round_up(dim, _LANE)
    inner_p = _round_up(inner, _LANE)
    if dim_p != dim or inner_p != inner:
        x2 = jnp.pad(x2, ((0, 0), (0, dim_p - dim)))
        w1 = jnp.pad(w1, ((0, dim_p - dim), (0, inner_p - inner)))
        b1 = jnp.pad(b1, ((0, 0), (0, inner_p - inner)))
        w2 = jnp.pad(w2, ((0, inner_p - inner), (0, dim_p - dim)))
        b2 = jnp.pad(b2, ((0, 0), (0, dim_p - dim)))

    budget = _vmem_budget_bytes()
    w_total = (2 * dim_p * inner_p + inner_p + dim_p) * w_bytes
    single_buf_w = w_total > (2 << 20)      # only bother once weights are sizeable
    w_bufs = 1 if single_buf_w else 2

    # --- pick execution plan ------------------------------------------------
    mode, tm, tk = None, None, None
    for tm_target in (1024, 512, 256, 128):          # largest row tile that fits
        cand = _pick_tm(n, sub, tm_target)
        if _resident_bytes(cand, dim_p, inner_p, act_bytes, w_bytes, w_bufs) <= budget:
            mode, tm = "resident", cand
            break
    if mode is None:                                 # stream the inner dimension
        for tm_target in (512, 256, 128):
            cand = _pick_tm(n, sub, tm_target)
            for tk_cand in (2048, 1024, 512, 256, 128):
                if inner_p % tk_cand:
                    continue
                if _tiled_bytes(cand, tk_cand, dim_p, act_bytes, w_bytes) <= budget:
                    mode, tm, tk = "tiled", cand, tk_cand
                    break
            if mode is not None:
                break
    if mode is None:                                 # last resort: smallest tiles
        mode, tm, tk = "tiled", _pick_tm(n, sub, 128), 128

    cost = pl.CostEstimate(
        flops=4 * n * dim_p * inner_p,               # two matmuls
        transcendentals=n * inner_p,                 # erf per hidden element
        bytes_accessed=(2 * n * dim_p * act_bytes
                        + (2 * dim_p * inner_p + inner_p + dim_p) * w_bytes),
    )

    if mode == "resident":
        grid = (pl.cdiv(n, tm),)
        out = pl.pallas_call(
            _ffn_kernel_resident,
            out_shape=jax.ShapeDtypeStruct((n, dim_p), out_dtype),
            grid_spec=pltpu.PrefetchScalarGridSpec(
                num_scalar_prefetch=0,
                grid=grid,
                in_specs=[
                    pl.BlockSpec((tm, dim_p), lambda i: (i, 0)),          # x rows
                    _weight_spec((dim_p, inner_p), lambda i: (0, 0), single_buf_w),
                    _weight_spec((1, inner_p), lambda i: (0, 0), single_buf_w),
                    _weight_spec((inner_p, dim_p), lambda i: (0, 0), single_buf_w),
                    _weight_spec((1, dim_p), lambda i: (0, 0), single_buf_w),
                ],
                out_specs=pl.BlockSpec((tm, dim_p), lambda i: (i, 0)),
            ),
            compiler_params=pltpu.CompilerParams(
                dimension_semantics=("parallel",),
                vmem_limit_bytes=budget,
            ),
            cost_estimate=cost,
        )(x2, w1, b1, w2, b2)
    else:
        grid = (pl.cdiv(n, tm), inner_p // tk)
        out = pl.pallas_call(
            _ffn_kernel_tiled,
            out_shape=jax.ShapeDtypeStruct((n, dim_p), out_dtype),
            grid_spec=pltpu.PrefetchScalarGridSpec(
                num_scalar_prefetch=0,
                grid=grid,
                in_specs=[
                    pl.BlockSpec((tm, dim_p), lambda i, k: (i, 0)),       # x rows
                    pl.BlockSpec((dim_p, tk), lambda i, k: (0, k)),       # W1 chunk
                    pl.BlockSpec((1, tk), lambda i, k: (0, k)),           # b1 chunk
                    pl.BlockSpec((tk, dim_p), lambda i, k: (k, 0)),       # W2 chunk
                    pl.BlockSpec((1, dim_p), lambda i, k: (0, 0)),        # b2
                ],
                out_specs=pl.BlockSpec((tm, dim_p), lambda i, k: (i, 0)),
                scratch_shapes=[pltpu.VMEM((tm, dim_p), jnp.float32)],
            ),
            compiler_params=pltpu.CompilerParams(
                dimension_semantics=("parallel", "arbitrary"),
                vmem_limit_bytes=budget,
            ),
            cost_estimate=cost,
        )(x2, w1, b1, w2, b2)

    if dim_p != dim:
        out = out[:, :dim]
    return out


def feedforward(x, w1, b1, w2, b2):
    """FeedForward forward pass. x: (batch, seq, dim) -> (batch, seq, dim).

    w1: (dim, inner), b1: (1, inner), w2: (inner, dim), b2: (1, dim)
    (torch nn.Linear weights, transposed).  Dropout(p=0.0) is identity.
    """
    batch, seq, dim = x.shape
    y = _feedforward_impl(x.reshape(batch * seq, dim), w1, b1, w2, b2)
    return y.reshape(batch, seq, dim)


# --------------------------------------------------------------------------
# Reference + self-test
# --------------------------------------------------------------------------
def _reference(x, w1, b1, w2, b2):
    hp = jax.lax.Precision.HIGHEST
    h = jnp.dot(x, w1, precision=hp) + b1[0]
    h = 0.5 * h * (1.0 + jax.lax.erf(h * jnp.float32(_SQRT_HALF)))
    return jnp.dot(h, w2, precision=hp) + b2[0]


if __name__ == "__main__":
    # Small shapes consistent with the module: dim=32, mult=4 -> inner_dim=128.
    batch, seq, dim, mult = 2, 8, 32, 4
    inner = dim * mult

    key = jax.random.PRNGKey(0)
    kx, kw1, kb1, kw2, kb2 = jax.random.split(key, 5)

    x = jax.random.normal(kx, (batch, seq, dim), dtype=jnp.float32)
    lim1 = 1.0 / float(np.sqrt(dim))
    lim2 = 1.0 / float(np.sqrt(inner))
    w1 = jax.random.uniform(kw1, (dim, inner), minval=-lim1, maxval=lim1,
                            dtype=jnp.float32)
    b1 = jax.random.uniform(kb1, (1, inner), minval=-lim1, maxval=lim1,
                            dtype=jnp.float32)
    w2 = jax.random.uniform(kw2, (inner, dim), minval=-lim2, maxval=lim2,
                            dtype=jnp.float32)
    b2 = jax.random.uniform(kb2, (1, dim), minval=-lim2, maxval=lim2,
                            dtype=jnp.float32)

    # f32 path. Tolerance documents the accepted drift from MXU f32
    # contraction passes (typically ~1e-6 with full-precision f32 passes).
    y = feedforward(x, w1, b1, w2, b2)
    jax.block_until_ready(y)
    y_ref = _reference(x.reshape(-1, dim), w1, b1, w2, b2).reshape(batch, seq, dim)
    assert jnp.allclose(y, y_ref, atol=2e-2, rtol=2e-2), "f32 mismatch vs reference"

    # bf16 path — native bf16 MXU matmuls with f32 accumulation (loose tol).
    y_bf16 = feedforward(x.astype(jnp.bfloat16),
                         w1.astype(jnp.bfloat16), b1.astype(jnp.bfloat16),
                         w2.astype(jnp.bfloat16), b2.astype(jnp.bfloat16))
    jax.block_until_ready(y_bf16)
    assert jnp.allclose(y_bf16.astype(jnp.float32), y_ref, atol=1e-1, rtol=1e-1), \
        "bf16 mismatch vs reference"

    print("KERNEL_OK")
</pallas_src>

<mosaic_0001>
module attributes {stable_mosaic.version = 11 : i64} {
  func.func @_ffn_kernel_resident(%arg0: i32, %arg1: memref<8x128xf32, #tpu.memory_space<vmem>>, %arg2: memref<128x128xf32, #tpu.memory_space<vmem>>, %arg3: memref<1x128xf32, #tpu.memory_space<vmem>>, %arg4: memref<128x128xf32, #tpu.memory_space<vmem>>, %arg5: memref<1x128xf32, #tpu.memory_space<vmem>>, %arg6: memref<8x128xf32, #tpu.memory_space<vmem>>) attributes {dimension_semantics = [#tpu.dimension_semantics<parallel>], iteration_bounds = array<i64: 2>, scalar_prefetch = 0 : i64, scratch_operands = 0 : i64, tpu.core_type = #tpu.core_type<tc>, window_params = [{transform_indices = @transform_0, window_bounds = array<i64: 8, 128>}, {pipeline_mode = #tpu.pipeline_mode<synchronous>, transform_indices = @transform_1, window_bounds = array<i64: 128, 128>}, {pipeline_mode = #tpu.pipeline_mode<synchronous>, transform_indices = @transform_2, window_bounds = array<i64: 1, 128>}, {pipeline_mode = #tpu.pipeline_mode<synchronous>, transform_indices = @transform_3, window_bounds = array<i64: 128, 128>}, {pipeline_mode = #tpu.pipeline_mode<synchronous>, transform_indices = @transform_4, window_bounds = array<i64: 1, 128>}, {transform_indices = @transform_5, window_bounds = array<i64: 8, 128>}]} {
    %c0 = arith.constant 0 : index
    %c0_0 = arith.constant 0 : index
    %0 = vector.load %arg1[%c0, %c0_0] : memref<8x128xf32, #tpu.memory_space<vmem>>, vector<8x128xf32>
    %c0_1 = arith.constant 0 : index
    %c0_2 = arith.constant 0 : index
    %1 = vector.load %arg2[%c0_1, %c0_2] : memref<128x128xf32, #tpu.memory_space<vmem>>, vector<128x128xf32>
    %cst = arith.constant dense<0.000000e+00> : vector<8x128xf32>
    %2 = tpu.matmul %0, %1, %cst {dimension_numbers = #tpu.dot_dimension_numbers<[1], [0], [0], [1], [0, 0, 1, 1], [], []>} : vector<8x128xf32>, vector<128x128xf32>, vector<8x128xf32> -> vector<8x128xf32>
    %c0_3 = arith.constant 0 : index
    %c0_4 = arith.constant 0 : index
    %3 = vector.load %arg3[%c0_3, %c0_4] : memref<1x128xf32, #tpu.memory_space<vmem>>, vector<1x128xf32>
    %4 = vector.broadcast %3 : vector<1x128xf32> to vector<8x128xf32>
    %5 = arith.addf %2, %4 : vector<8x128xf32>
    %cst_5 = arith.constant 5.000000e-01 : f32
    %6 = vector.broadcast %cst_5 : f32 to vector<8x128xf32>
    %7 = arith.mulf %6, %5 : vector<8x128xf32>
    %cst_6 = arith.constant 0.707106769 : f32
    %8 = vector.broadcast %cst_6 : f32 to vector<8x128xf32>
    %9 = arith.mulf %5, %8 : vector<8x128xf32>
    %10 = math.erf %9 : vector<8x128xf32>
    %cst_7 = arith.constant 1.000000e+00 : f32
    %11 = vector.broadcast %cst_7 : f32 to vector<8x128xf32>
    %12 = arith.addf %11, %10 : vector<8x128xf32>
    %13 = arith.mulf %7, %12 : vector<8x128xf32>
    %c0_8 = arith.constant 0 : index
    %c0_9 = arith.constant 0 : index
    %14 = vector.load %arg4[%c0_8, %c0_9] : memref<128x128xf32, #tpu.memory_space<vmem>>, vector<128x128xf32>
    %cst_10 = arith.constant dense<0.000000e+00> : vector<8x128xf32>
    %15 = tpu.matmul %13, %14, %cst_10 {dimension_numbers = #tpu.dot_dimension_numbers<[1], [0], [0], [1], [0, 0, 1, 1], [], []>} : vector<8x128xf32>, vector<128x128xf32>, vector<8x128xf32> -> vector<8x128xf32>
    %c0_11 = arith.constant 0 : index
    %c0_12 = arith.constant 0 : index
    %16 = vector.load %arg5[%c0_11, %c0_12] : memref<1x128xf32, #tpu.memory_space<vmem>>, vector<1x128xf32>
    %17 = vector.broadcast %16 : vector<1x128xf32> to vector<8x128xf32>
    %18 = arith.addf %15, %17 : vector<8x128xf32>
    %c0_13 = arith.constant 0 : index
    %c0_14 = arith.constant 0 : index
    %19 = vector.load %arg6[%c0_13, %c0_14] : memref<8x128xf32, #tpu.memory_space<vmem>>, vector<8x128xf32>
    tpu.vector_store %arg6[%c0_13, %c0_14], %18 {strides = array<i32>} : memref<8x128xf32, #tpu.memory_space<vmem>>, vector<8x128xf32>,
    return
  }
  func.func @transform_0(%arg0: i32) -> (i32, i32) {
    %c0_i32 = arith.constant 0 : i32
    %c0_i32_0 = arith.constant 0 : i32
    return %arg0, %c0_i32 : i32, i32
  }
  func.func @transform_1(%arg0: i32) -> (i32, i32) {
    %c0_i32 = arith.constant 0 : i32
    %c0_i32_0 = arith.constant 0 : i32
    %c0_i32_1 = arith.constant 0 : i32
    return %c0_i32, %c0_i32_0 : i32, i32
  }
  func.func @transform_2(%arg0: i32) -> (i32, i32) {
    %c0_i32 = arith.constant 0 : i32
    %c0_i32_0 = arith.constant 0 : i32
    %c0_i32_1 = arith.constant 0 : i32
    return %c0_i32, %c0_i32_0 : i32, i32
  }
  func.func @transform_3(%arg0: i32) -> (i32, i32) {
    %c0_i32 = arith.constant 0 : i32
    %c0_i32_0 = arith.constant 0 : i32
    %c0_i32_1 = arith.constant 0 : i32
    return %c0_i32, %c0_i32_0 : i32, i32
  }
  func.func @transform_4(%arg0: i32) -> (i32, i32) {
    %c0_i32 = arith.constant 0 : i32
    %c0_i32_0 = arith.constant 0 : i32
    %c0_i32_1 = arith.constant 0 : i32
    return %c0_i32, %c0_i32_0 : i32, i32
  }
  func.func @transform_5(%arg0: i32) -> (i32, i32) {
    %c0_i32 = arith.constant 0 : i32
    %c0_i32_0 = arith.constant 0 : i32
    return %arg0, %c0_i32 : i32, i32
  }
}

</mosaic_0001>

<llo_original>
// kernel: _feedforward_impl.1
$region0: #{_feedforward_impl.1}
  #allocation0 [shape = 'u32[]', space=smem, size = 0x4, offset = 0x4, fixed_abs, tag = 'smem constant byte address 0x4 - core index']
  #allocation1 [shape = 'u32[144,128]{1,0:T(1,128)}', space=vmem, size = 0x12000, scoped, tag = 'internal scratch']
  %s0 = inlined_call_operand.vmem [shape: f32[16,128], index: 0, kind: input, shape index: {}]
  %s1 = inlined_call_operand.vmem [shape: f32[128,128], index: 1, kind: input, shape index: {}]
  %s2 = inlined_call_operand.vmem [shape: f32[1,128], index: 2, kind: input, shape index: {}]
  %s3 = inlined_call_operand.vmem [shape: f32[128,128], index: 3, kind: input, shape index: {}]
  %s4 = inlined_call_operand.vmem [shape: f32[1,128], index: 4, kind: input, shape index: {}]
  %s5 = inlined_call_operand.hbm [shape: f32[16,128], index: 5, kind: output, shape index: {}]
  %s6 = sld [smem:[#allocation0]]
  $region53: #{_feedforward_impl.1} parent=0
    _
  %s8 = ssub.s32 1, %s6
  %s9 = scalar_select 0, %s8, %s6
  $region1: #{_feedforward_impl.1} parent=0
    #allocation2 [shape = 'u8[8192]{0}', space=vmem, size = 0x2000, scoped, tag = 'output window, operand 0']
    #allocation3 [shape = 's32[2]{0}', space=sflag, size = 0x8, scoped, tag = 'scoped memory for _feedforward_impl.1']
    %10 = vsyncpa [#allocation3], 0
    %s11 = scalar_lea.sflag [#allocation3], 1
    %12 = vsyncpa %s11, 0
    loop: start=0, step=1, limit=4
    $region2: #{_feedforward_impl.1} parent=1 // loop_pre_header
      _
    $region3: #{_feedforward_impl.1} parent=1 // loop_header
      %s14 = sphi 0, %s18
      %p15 = scmp.ge.s32.totalorder %s14, 4
      %s24 = sphi 0, %s26
      %s27 = sphi 0, %s24
      %s28 = sphi 0, %s27
      %s44 = sphi 0, %s28
      %s48 = sphi 0, %s48
      %s50 = sphi 0, %s48
      %s51 = sphi 0, %s50
      %s65 = sphi 0, %s51
      %s69 = sphi 0, %s69
      %s71 = sphi 0, %s69
      %s72 = sphi 0, %s71
      %s86 = sphi 0, %s72
      %s90 = sphi 0, %s90
      %s92 = sphi 0, %s90
      %s93 = sphi 0, %s92
      %s107 = sphi 0, %s93
      %s111 = sphi 0, %s111
      %s113 = sphi 0, %s111
      %s114 = sphi 0, %s113
      %s128 = sphi 0, %s114
      %s134 = sphi 0, %s136
      %s137 = sphi 0, %s134
      %s138 = sphi 0, %s137
      %s154 = sphi 0, %s138
    $region4: #{_feedforward_impl.1} parent=1 // loop_header_branch
      %17 = sbr.rel (%p15) target = $region8
    $region5: #{_feedforward_impl.1} parent=1 // loop_body
      %s19 = ssub.s32 %s14, 1
      %s20 = ssub.s32 %s14, 2
      %s21 = sadd.s32 %s14, 1
      %s22 = ssub.s32 %s14, %s21
      %p23 = scmp.eq.s32.totalorder %s22, 0
      %s25 = sadd.s32 %s24, 1
      %s26 = scalar_select %p23, %s24, %s25
      %p29 = pneg %p23
      %p30 = scmp.eq.s32.totalorder %s14, 1
      %p31 = por %p29, %p30
      %p32 = scmp.ne.s32.totalorder %s24, %s27
      %p33 = scmp.eq.s32.totalorder %s14, 0
      %p34 = por %p32, %p33
      %p35 = scmp.ne.s32.totalorder %s24, %s27
      %p36 = scmp.eq.s32.totalorder %s19, 1
      %p37 = por %p35, %p36
      %p38 = scmp.ne.s32.totalorder %s27, %s28
      %p39 = scmp.eq.s32.totalorder %s19, 0
      %p40 = por %p38, %p39
      %p41 = scmp.ne.s32.totalorder %s27, %s28
      %p42 = scmp.eq.s32.totalorder %s20, 1
      %p43 = por %p41, %p42
      %p45 = scmp.ne.s32.totalorder %s28, %s44
      %p46 = scmp.eq.s32.totalorder %s20, 0
      %p47 = por %p45, %p46
      %s49 = sadd.s32 %s48, 1
      %p52 = scmp.eq.s32.totalorder %s14, 1
      %p53 = scmp.ne.s32.totalorder %s48, %s50
      %p54 = scmp.eq.s32.totalorder %s14, 0
      %p55 = por %p53, %p54
      %p56 = scmp.ne.s32.totalorder %s48, %s50
      %p57 = scmp.eq.s32.totalorder %s19, 1
      %p58 = por %p56, %p57
      %p59 = scmp.ne.s32.totalorder %s50, %s51
      %p60 = scmp.eq.s32.totalorder %s19, 0
      %p61 = por %p59, %p60
      %p62 = scmp.ne.s32.totalorder %s50, %s51
      %p63 = scmp.eq.s32.totalorder %s20, 1
      %p64 = por %p62, %p63
      %p66 = scmp.ne.s32.totalorder %s51, %s65
      %p67 = scmp.eq.s32.totalorder %s20, 0
      %p68 = por %p66, %p67
      %s70 = sadd.s32 %s69, 1
      %p73 = scmp.eq.s32.totalorder %s14, 1
      %p74 = scmp.ne.s32.totalorder %s69, %s71
      %p75 = scmp.eq.s32.totalorder %s14, 0
      %p76 = por %p74, %p75
      %p77 = scmp.ne.s32.totalorder %s69, %s71
      %p78 = scmp.eq.s32.totalorder %s19, 1
      %p79 = por %p77, %p78
      %p80 = scmp.ne.s32.totalorder %s71, %s72
      %p81 = scmp.eq.s32.totalorder %s19, 0
      %p82 = por %p80, %p81
      %p83 = scmp.ne.s32.totalorder %s71, %s72
      %p84 = scmp.eq.s32.totalorder %s20, 1
      %p85 = por %p83, %p84
      %p87 = scmp.ne.s32.totalorder %s72, %s86
      %p88 = scmp.eq.s32.totalorder %s20, 0
      %p89 = por %p87, %p88
      %s91 = sadd.s32 %s90, 1
      %p94 = scmp.eq.s32.totalorder %s14, 1
      %p95 = scmp.ne.s32.totalorder %s90, %s92
      %p96 = scmp.eq.s32.totalorder %s14, 0
      %p97 = por %p95, %p96
      %p98 = scmp.ne.s32.totalorder %s90, %s92
      %p99 = scmp.eq.s32.totalorder %s19, 1
      %p100 = por %p98, %p99
      %p101 = scmp.ne.s32.totalorder %s92, %s93
      %p102 = scmp.eq.s32.totalorder %s19, 0
      %p103 = por %p101, %p102
      %p104 = scmp.ne.s32.totalorder %s92, %s93
      %p105 = scmp.eq.s32.totalorder %s20, 1
      %p106 = por %p104, %p105
      %p108 = scmp.ne.s32.totalorder %s93, %s107
      %p109 = scmp.eq.s32.totalorder %s20, 0
      %p110 = por %p108, %p109
      %s112 = sadd.s32 %s111, 1
      %p115 = scmp.eq.s32.totalorder %s14, 1
      %p116 = scmp.ne.s32.totalorder %s111, %s113
      %p117 = scmp.eq.s32.totalorder %s14, 0
      %p118 = por %p116, %p117
      %p119 = scmp.ne.s32.totalorder %s111, %s113
      %p120 = scmp.eq.s32.totalorder %s19, 1
      %p121 = por %p119, %p120
      %p122 = scmp.ne.s32.totalorder %s113, %s114
      %p123 = scmp.eq.s32.totalorder %s19, 0
      %p124 = por %p122, %p123
      %p125 = scmp.ne.s32.totalorder %s113, %s114
      %p126 = scmp.eq.s32.totalorder %s20, 1
      %p127 = por %p125, %p126
      %p129 = scmp.ne.s32.totalorder %s114, %s128
      %p130 = scmp.eq.s32.totalorder %s20, 0
      %p131 = por %p129, %p130
      %s132 = ssub.s32 %s14, %s21
      %p133 = scmp.eq.s32.totalorder %s132, 0
      %s135 = sadd.s32 %s134, 1
      %s136 = scalar_select %p133, %s134, %s135
      %p139 = pneg %p133
      %p140 = scmp.eq.s32.totalorder %s14, 1
      %p141 = por %p139, %p140
      %p142 = scmp.ne.s32.totalorder %s134, %s137
      %p143 = scmp.eq.s32.totalorder %s14, 0
      %p144 = por %p142, %p143
      %p145 = scmp.ne.s32.totalorder %s134, %s137
      %p146 = scmp.eq.s32.totalorder %s19, 1
      %p147 = por %p145, %p146
      %p148 = scmp.ne.s32.totalorder %s137, %s138
      %p149 = scmp.eq.s32.totalorder %s19, 0
      %p150 = por %p148, %p149
      %p151 = scmp.ne.s32.totalorder %s137, %s138
      %p152 = scmp.eq.s32.totalorder %s20, 1
      %p153 = por %p151, %p152
      %p155 = scmp.ne.s32.totalorder %s138, %s154
      %p156 = scmp.eq.s32.totalorder %s20, 0
      %p157 = por %p155, %p156
      %p158 = scmp.le.s32.totalorder 1, %s14
      %p159 = scmp.lt.s32.totalorder %s14, 3
      %p160 = pnand %p158, %p159
      %p161 = pneg %p160
      // Predicated region
      $region9: #{_feedforward_impl.1} parent=5 // pred_check
        _
      $region10: #{_feedforward_impl.1} parent=5 // pred_check_branch
        %163 = sbr.rel (%p160) target = $region12
      $region11: #{_feedforward_impl.1} parent=5 // pred_region
        %s164 = ssub.s32 %s14, 1
        // Predicated region
        $region13: #{_feedforward_impl.1} parent=11 // pred_check
          %p165 = pneg %p61
        $region14: #{_feedforward_impl.1} parent=11 // pred_check_branch
          %167 = sbr.rel (%p165) target = $region16
        $region15: #{_feedforward_impl.1} parent=11 // pred_region
          _
        $region16: #{_feedforward_impl.1} parent=11 // pred_fallthru
          _
        // Predicated region
        $region17: #{_feedforward_impl.1} parent=11 // pred_check
          %p168 = pneg %p82
        $region18: #{_feedforward_impl.1} parent=11 // pred_check_branch
          %170 = sbr.rel (%p168) target = $region20
        $region19: #{_feedforward_impl.1} parent=11 // pred_region
          _
        $region20: #{_feedforward_impl.1} parent=11 // pred_fallthru
          _
        // Predicated region
        $region21: #{_feedforward_impl.1} parent=11 // pred_check
          %p171 = pneg %p103
        $region22: #{_feedforward_impl.1} parent=11 // pred_check_branch
          %173 = sbr.rel (%p171) target = $region24
        $region23: #{_feedforward_impl.1} parent=11 // pred_region
          _
        $region24: #{_feedforward_impl.1} parent=11 // pred_fallthru
          _
        // Predicated region
        $region25: #{_feedforward_impl.1} parent=11 // pred_check
          %p174 = pneg %p124
        $region26: #{_feedforward_impl.1} parent=11 // pred_check_branch
          %176 = sbr.rel (%p174) target = $region28
        $region27: #{_feedforward_impl.1} parent=11 // pred_region
          _
        $region28: #{_feedforward_impl.1} parent=11 // pred_fallthru
          _
      $region12: #{_feedforward_impl.1} parent=5 // pred_fallthru
        _
      %p177 = scmp.lt.s32.totalorder %s14, 2
      // Predicated region
      $region29: #{_feedforward_impl.1} parent=5 // pred_check
        %p178 = pneg %p177
      $region30: #{_feedforward_impl.1} parent=5 // pred_check_branch
        %180 = sbr.rel (%p178) target = $region32
      $region31: #{_feedforward_impl.1} parent=5 // pred_region
        // Predicated region
        $region33: #{_feedforward_impl.1} parent=31 // pred_check
          %p181 = pneg %p34
        $region34: #{_feedforward_impl.1} parent=31 // pred_check_branch
          %183 = sbr.rel (%p181) target = $region36
        $region35: #{_feedforward_impl.1} parent=31 // pred_region
          %p184 = scmp.lt.s32.totalorder %s14, 1
          %s185 = scalar_select %p184, %s14, 1
          %s186 = smul.addr %s185, 8
          %s187 = scalar_lea.vmem %s0, %s186
        $region36: #{_feedforward_impl.1} parent=31 // pred_fallthru
          _
      $region32: #{_feedforward_impl.1} parent=5 // pred_fallthru
        _
      %p188 = scmp.le.s32.totalorder 1, %s14
      %p189 = scmp.lt.s32.totalorder %s14, 3
      %p190 = pnand %p188, %p189
      %p191 = pneg %p190
      // Predicated region
      $region37: #{_feedforward_impl.1} parent=5 // pred_check
        _
      $region38: #{_feedforward_impl.1} parent=5 // pred_check_branch
        %193 = sbr.rel (%p190) target = $region40
      $region39: #{_feedforward_impl.1} parent=5 // pred_region
        %s194 = ssub.s32 %s14, 1
        %p195 = scmp.lt.s32.totalorder %s19, 1
        %s196 = scalar_select %p195, %s19, 1
        %s197 = smul.addr %s196, 8
        %s198 = scalar_lea.vmem %s0, %s197
        %p199 = pneg %p40
        %p200 = pneg %p37
        %p201 = pneg %p61
        %p202 = pneg %p58
        %p203 = pneg %p82
        %p204 = pneg %p79
        %p205 = pneg %p103
        %p206 = pneg %p100
        %p207 = pneg %p124
        %p208 = pneg %p121
        %p209 = pneg %p150
        %p210 = pneg %p147
        %s211 = sand.u32 %s137, 1
        %s212 = scalar_lea.sflag [#allocation3], %s211
        %s213 = sand.u32 %s137, 1
        %s214 = smul.addr %s213, 8
        %s215 = scalar_lea.vmem [#allocation2], %s214
        %p216 = scmp.lt.s32.totalorder %s19, 1
        %s217 = scalar_select %p216, %s19, 1
        %s218 = smul.addr %s217, 8
        %s219 = scalar_lea.vmem %s0, %s218
        %v220 = vld [vmem:[%s219] sm:$0xff]
        %v221 = vld [vmem:[%s1] sm:$0xff]
        %v222 = vld [vmem:[%s1 + $0x8] sm:$0xff]
        %v223 = vld [vmem:[%s1 + $0x10] sm:$0xff]
        %v224 = vld [vmem:[%s1 + $0x18] sm:$0xff]
        %v225 = vld [vmem:[%s1 + $0x20] sm:$0xff]
        %v226 = vld [vmem:[%s1 + $0x28] sm:$0xff]
        %v227 = vld [vmem:[%s1 + $0x30] sm:$0xff]
        %v228 = vld [vmem:[%s1 + $0x38] sm:$0xff]
        %v229 = vld [vmem:[%s1 + $0x40] sm:$0xff]
        %v230 = vld [vmem:[%s1 + $0x48] sm:$0xff]
        %v231 = vld [vmem:[%s1 + $0x50] sm:$0xff]
        %v232 = vld [vmem:[%s1 + $0x58] sm:$0xff]
        %v233 = vld [vmem:[%s1 + $0x60] sm:$0xff]
        %v234 = vld [vmem:[%s1 + $0x68] sm:$0xff]
        %v235 = vld [vmem:[%s1 + $0x70] sm:$0xff]
        %v236 = vld [vmem:[%s1 + $0x78] sm:$0xff]
        %v237 = vld [vmem:[%s2] sm:$0x1]
        %v239 = vlaneseq
        %v240 = vshrl.u32 %v239, 7
        %v241 = vsub.s32 0, %v240
        %v242 = vrot.slane %v237, %v241
        %244 = vmatprep.subr.mxu0 0.0
        %245 = vmatpush1.msra.mxu0 %v221
        %246 = vmatprep.subr.mxu0 0.0
        %247 = vmatpush1.msra.mxu0 %v222
        %248 = vmatprep.subr.mxu0 0.0
        %249 = vmatpush1.msra.mxu0 %v223
        %250 = vmatprep.subr.mxu0 0.0
        %251 = vmatpush1.msra.mxu0 %v224
        %252 = vmatprep.subr.mxu0 0.0
        %253 = vmatpush1.msra.mxu0 %v225
        %254 = vmatprep.subr.mxu0 0.0
        %255 = vmatpush1.msra.mxu0 %v226
        %256 = vmatprep.subr.mxu0 0.0
        %257 = vmatpush1.msra.mxu0 %v227
        %258 = vmatprep.subr.mxu0 0.0
        %259 = vmatpush1.msra.mxu0 %v228
        %260 = vmatprep.subr.mxu0 0.0
        %261 = vmatpush1.msra.mxu0 %v229
        %262 = vmatprep.subr.mxu0 0.0
        %263 = vmatpush1.msra.mxu0 %v230
        %264 = vmatprep.subr.mxu0 0.0
        %265 = vmatpush1.msra.mxu0 %v231
        %266 = vmatprep.subr.mxu0 0.0
        %267 = vmatpush1.msra.mxu0 %v232
        %268 = vmatprep.subr.mxu0 0.0
        %269 = vmatpush1.msra.mxu0 %v233
        %270 = vmatprep.subr.mxu0 0.0
        %271 = vmatpush1.msra.mxu0 %v234
        %272 = vmatprep.subr.mxu0 0.0
        %273 = vmatpush1.msra.mxu0 %v235
        %274 = vmatprep.subr.mxu0 0.0
        %275 = vmatpush1.msra.mxu0 %v236
        %276 = vmatprep.subr.mxu0 0.0
        %277 = vmatpush1.msra.mxu0 0.0
        %278 = vmatprep.subr.mxu0 0.0
        %279 = vmatpush1.msra.mxu0 0.0
        %280 = vmatprep.subr.mxu0 0.0
        %281 = vmatpush1.msra.mxu0 0.0
        %282 = vmatprep.subr.mxu0 0.0
        %283 = vmatpush1.msra.mxu0 0.0
        %284 = vmatprep.subr.mxu0 0.0
        %285 = vmatpush1.msra.mxu0 0.0
        %286 = vmatprep.subr.mxu0 0.0
        %287 = vmatpush1.msra.mxu0 0.0
        %288 = vmatprep.subr.mxu0 0.0
        %289 = vmatpush1.msra.mxu0 0.0
        %290 = vmatprep.subr.mxu0 0.0
        %291 = vmatpush1.msra.mxu0 0.0
        %292 = vmatprep.subr.mxu0 0.0
        %293 = vmatpush1.msra.mxu0 0.0
        %294 = vmatprep.subr.mxu0 0.0
        %295 = vmatpush1.msra.mxu0 0.0
        %296 = vmatprep.subr.mxu0 0.0
        %297 = vmatpush1.msra.mxu0 0.0
        %298 = vmatprep.subr.mxu0 0.0
        %299 = vmatpush1.msra.mxu0 0.0
        %300 = vmatprep.subr.mxu0 0.0
        %301 = vmatpush1.msra.mxu0 0.0
        %302 = vmatprep.subr.mxu0 0.0
        %303 = vmatpush1.msra.mxu0 0.0
        %304 = vmatprep.subr.mxu0 0.0
        %305 = vmatpush1.msra.mxu0 0.0
        %306 = vmatprep.subr.mxu0 0.0
        %307 = vmatpush1.msra.mxu0 0.0
        %308 = vmatprep.mubr.f32.mxu0 0.0
        %309 = vmatmul.mubr.f32.gmra.mrb[0].mxu0 %v220
        %v310 = vpop.f32.mrb[0].mxu0
        %v311 = vadd.f32 %v242, %v310
        %v312 = vpop.f32.mrb[0].mxu0
        %313 = vdwg.mxu0
        %v314 = vmul.f32 %v311, 0.5
        %v315 = vmul.f32 %v311, 0.70710677
        %v316 = verf.f32.pop %v315
        %v317 = vadd.f32 %v316, 1.0
        %v318 = vmul.f32 %v314, %v317
        %v319 = vld [vmem:[%s3] sm:$0xff]
        %v320 = vld [vmem:[%s3 + $0x8] sm:$0xff]
        %v321 = vld [vmem:[%s3 + $0x10] sm:$0xff]
        %v322 = vld [vmem:[%s3 + $0x18] sm:$0xff]
        %v323 = vld [vmem:[%s3 + $0x20] sm:$0xff]
        %v324 = vld [vmem:[%s3 + $0x28] sm:$0xff]
        %v325 = vld [vmem:[%s3 + $0x30] sm:$0xff]
        %v326 = vld [vmem:[%s3 + $0x38] sm:$0xff]
        %v327 = vld [vmem:[%s3 + $0x40] sm:$0xff]
        %v328 = vld [vmem:[%s3 + $0x48] sm:$0xff]
        %v329 = vld [vmem:[%s3 + $0x50] sm:$0xff]
        %v330 = vld [vmem:[%s3 + $0x58] sm:$0xff]
        %v331 = vld [vmem:[%s3 + $0x60] sm:$0xff]
        %v332 = vld [vmem:[%s3 + $0x68] sm:$0xff]
        %v333 = vld [vmem:[%s3 + $0x70] sm:$0xff]
        %v334 = vld [vmem:[%s3 + $0x78] sm:$0xff]
        %v335 = vld [vmem:[%s4] sm:$0x1]
        %v337 = vlaneseq
        %v338 = vshrl.u32 %v337, 7
        %v339 = vsub.s32 0, %v338
        %v340 = vrot.slane %v335, %v339
        %342 = vmatprep.subr.mxu0 0.0
        %343 = vmatpush1.msra.mxu0 %v319
        %344 = vmatprep.subr.mxu0 0.0
        %345 = vmatpush1.msra.mxu0 %v320
        %346 = vmatprep.subr.mxu0 0.0
        %347 = vmatpush1.msra.mxu0 %v321
        %348 = vmatprep.subr.mxu0 0.0
        %349 = vmatpush1.msra.mxu0 %v322
        %350 = vmatprep.subr.mxu0 0.0
        %351 = vmatpush1.msra.mxu0 %v323
        %352 = vmatprep.subr.mxu0 0.0
        %353 = vmatpush1.msra.mxu0 %v324
        %354 = vmatprep.subr.mxu0 0.0
        %355 = vmatpush1.msra.mxu0 %v325
        %356 = vmatprep.subr.mxu0 0.0
        %357 = vmatpush1.msra.mxu0 %v326
        %358 = vmatprep.subr.mxu0 0.0
        %359 = vmatpush1.msra.mxu0 %v327
        %360 = vmatprep.subr.mxu0 0.0
        %361 = vmatpush1.msra.mxu0 %v328
        %362 = vmatprep.subr.mxu0 0.0
        %363 = vmatpush1.msra.mxu0 %v329
        %364 = vmatprep.subr.mxu0 0.0
        %365 = vmatpush1.msra.mxu0 %v330
        %366 = vmatprep.subr.mxu0 0.0
        %367 = vmatpush1.msra.mxu0 %v331
        %368 = vmatprep.subr.mxu0 0.0
        %369 = vmatpush1.msra.mxu0 %v332
        %370 = vmatprep.subr.mxu0 0.0
        %371 = vmatpush1.msra.mxu0 %v333
        %372 = vmatprep.subr.mxu0 0.0
        %373 = vmatpush1.msra.mxu0 %v334
        %374 = vmatprep.subr.mxu0 0.0
        %375 = vmatpush1.msra.mxu0 0.0
        %376 = vmatprep.subr.mxu0 0.0
        %377 = vmatpush1.msra.mxu0 0.0
        %378 = vmatprep.subr.mxu0 0.0
        %379 = vmatpush1.msra.mxu0 0.0
        %380 = vmatprep.subr.mxu0 0.0
        %381 = vmatpush1.msra.mxu0 0.0
        %382 = vmatprep.subr.mxu0 0.0
        %383 = vmatpush1.msra.mxu0 0.0
        %384 = vmatprep.subr.mxu0 0.0
        %385 = vmatpush1.msra.mxu0 0.0
        %386 = vmatprep.subr.mxu0 0.0
        %387 = vmatpush1.msra.mxu0 0.0
        %388 = vmatprep.subr.mxu0 0.0
        %389 = vmatpush1.msra.mxu0 0.0
        %390 = vmatprep.subr.mxu0 0.0
        %391 = vmatpush1.msra.mxu0 0.0
        %392 = vmatprep.subr.mxu0 0.0
        %393 = vmatpush1.msra.mxu0 0.0
        %394 = vmatprep.subr.mxu0 0.0
        %395 = vmatpush1.msra.mxu0 0.0
        %396 = vmatprep.subr.mxu0 0.0
        %397 = vmatpush1.msra.mxu0 0.0
        %398 = vmatprep.subr.mxu0 0.0
        %399 = vmatpush1.msra.mxu0 0.0
        %400 = vmatprep.subr.mxu0 0.0
        %401 = vmatpush1.msra.mxu0 0.0
        %402 = vmatprep.subr.mxu0 0.0
        %403 = vmatpush1.msra.mxu0 0.0
        %404 = vmatprep.subr.mxu0 0.0
        %405 = vmatpush1.msra.mxu0 0.0
        %406 = vmatprep.mubr.f32.mxu0 0.0
        %407 = vmatmul.mubr.f32.gmra.mrb[0].mxu0 %v318
        %v408 = vpop.f32.mrb[0].mxu0
        %v409 = vadd.f32 %v340, %v408
        %v410 = vpop.f32.mrb[0].mxu0
        %411 = vdwg.mxu0
        %412 = vst [vmem:[%s215] sm:$0xff] %v409
        %s413 = sand.u32 %s137, 1
        %s414 = scalar_lea.sflag [#allocation3], %s413
        %s415 = sand.u32 %s137, 1
        %s416 = smul.addr %s415, 8
        %s417 = scalar_lea.vmem [#allocation2], %s416
        // Predicated region
        $region41: #{_feedforward_impl.1} parent=39 // pred_check
          %p418 = pneg %p147
        $region42: #{_feedforward_impl.1} parent=39 // pred_check_branch
          %420 = sbr.rel (%p418) target = $region44
        $region43: #{_feedforward_impl.1} parent=39 // pred_region
          %s422 = ssub.s32 128, 128
          %423 = vsyncadd %s414, %s422
          %s424 = smul.addr %s19, 128
          %s425 = scalar_lea.hbm %s5, %s424
          %s427 = sshll.u32 %s417, 4
          %s428 = int_to_ptr.vmem [resolvable:$true] %s427
          %430 = dma.vmem_to_hbm [thread:$0]  %s428, 128, %s425, %s414
        $region44: #{_feedforward_impl.1} parent=39 // pred_fallthru
          _
      $region40: #{_feedforward_impl.1} parent=5 // pred_fallthru
        _
      %p431 = scmp.le.s32.totalorder 2, %s14
      // Predicated region
      $region45: #{_feedforward_impl.1} parent=5 // pred_check
        %p432 = pneg %p431
      $region46: #{_feedforward_impl.1} parent=5 // pred_check_branch
        %434 = sbr.rel (%p432) target = $region48
      $region47: #{_feedforward_impl.1} parent=5 // pred_region
        %s435 = ssub.s32 %s14, 2
        // Predicated region
        $region49: #{_feedforward_impl.1} parent=47 // pred_check
          %p436 = pneg %p153
        $region50: #{_feedforward_impl.1} parent=47 // pred_check_branch
          %438 = sbr.rel (%p436) target = $region52
        $region51: #{_feedforward_impl.1} parent=47 // pred_region
          %s439 = sand.u32 %s138, 1
          %s440 = scalar_lea.sflag [#allocation3], %s439
          %s441 = sand.u32 %s138, 1
          %s442 = smul.addr %s441, 8
          %s443 = scalar_lea.vmem [#allocation2], %s442
          %444 = dma.done %s440, 128
        $region52: #{_feedforward_impl.1} parent=47 // pred_fallthru
          _
      $region48: #{_feedforward_impl.1} parent=5 // pred_fallthru
        _
    $region6: #{_feedforward_impl.1} parent=1 // loop_footer
      %s18 = sadd.s32 1, %s14
    $region7: #{_feedforward_impl.1} parent=1 // loop_footer_branch
      %13 = sbr.rel target = $region3
    $region8: #{_feedforward_impl.1} parent=1 // loop_exit
      _
    %445 = vsyncpa [#allocation3], 1
    %s446 = scalar_lea.sflag [#allocation3], 1
    %447 = vsyncpa %s446, 1

</llo_original>
